<compile_context>
chip_gen: v6e
topology: v6e:2x2x1
jax: 0.10.0
libtpu: 0.0.40
codegen_flags: <defaults>
</compile_context>

<pallas_src>
import functools

import jax
import jax.numpy as jnp
from jax import lax
from jax.experimental import pallas as pl
from jax.experimental.pallas import tpu as pltpu


# ----------------------------------------------------------------------------
# Fast path: hw % 128 == 0.  Arrays viewed as (n, c, np128, 128); each block is
# (c, ts, 128): channels on the leading (untiled) axis, pixel rows on sublanes,
# pixel columns on lanes.
# ----------------------------------------------------------------------------
def _dice_sums_kernel_3d(x_ref, t_ref, out_ref, acc_ref, *, np128, ts, need_mask):
    """Per-batch, per-channel partial sums.

    x_ref, t_ref : (c, ts, 128) logits / target tile.
    out_ref      : (3, c) -> rows [sum(t*softmax), sum(softmax), sum(t)].
    acc_ref      : (3, c, R, 128) VMEM accumulator (R = 8, or ts when ts < 8).
    """
    j = pl.program_id(1)
    nj = pl.num_programs(1)

    @pl.when(j == 0)
    def _():
        acc_ref[...] = jnp.zeros_like(acc_ref)

    x = x_ref[...].astype(jnp.float32)   # (c, ts, 128)
    t = t_ref[...].astype(jnp.float32)   # (c, ts, 128)
    c = x.shape[0]

    # Numerically stable softmax over channels.  Reductions over the leading
    # c axis are plain elementwise VPU max/add across dense (ts, 128) slabs.
    m = jnp.max(x, axis=0, keepdims=True)             # (1, ts, 128)
    e = jnp.exp(x - m)                                # EUP
    denom = jnp.sum(e, axis=0, keepdims=True)         # (1, ts, 128)
    sm = e * pl.reciprocal(denom, approx=False)       # EUP reciprocal

    def accumulate(sm_v, t_v):
        tp = t_v * sm_v
        if ts % 8 == 0:
            # Fold (c, ts, 128) -> (c, ts//8, 8, 128) (tile-aligned, free) and
            # sum over axis 1: pure VPU adds of full vregs into the scratch.
            def fold(a):
                return jnp.sum(a.reshape(c, ts // 8, 8, 128), axis=1)
            acc_ref[0] += fold(tp)
            acc_ref[1] += fold(sm_v)
            acc_ref[2] += fold(t_v)
        else:
            # ts < 8 only happens in the single-tile (full-extent) case.
            acc_ref[0] += tp
            acc_ref[1] += sm_v
            acc_ref[2] += t_v

    if need_mask:
        @pl.when(j == nj - 1)
        def _():
            # OOB sublane rows of the tail tile hold unspecified data (can be
            # NaN/Inf after exp) -- select, never multiply.
            row = lax.broadcasted_iota(jnp.int32, (1, ts, 128), 1)
            valid = (j * ts + row) < np128
            accumulate(jnp.where(valid, sm, 0.0), jnp.where(valid, t, 0.0))

        @pl.when(j != nj - 1)
        def _():
            accumulate(sm, t)
    else:
        accumulate(sm, t)

    @pl.when(j == nj - 1)
    def _():
        total = acc_ref[...]                     # (3, c, R, 128)
        total = jnp.sum(total, axis=2)           # (3, c, 128)  sublane reduce
        out_ref[...] = jnp.sum(total, axis=-1)   # (3, c)       lane reduce (once)


def _dice_sums_3d(x4, t4, *, np128, ts, vmem_limit_bytes):
    n, c = x4.shape[0], x4.shape[1]
    grid_j = pl.cdiv(np128, ts)
    need_mask = (np128 % ts) != 0
    acc_rows = 8 if ts % 8 == 0 else ts
    kernel = functools.partial(
        _dice_sums_kernel_3d, np128=np128, ts=ts, need_mask=need_mask)
    return pl.pallas_call(
        kernel,
        out_shape=jax.ShapeDtypeStruct((n, 3, c), jnp.float32),
        grid_spec=pltpu.PrefetchScalarGridSpec(
            num_scalar_prefetch=0,
            grid=(n, grid_j),
            in_specs=[
                pl.BlockSpec((None, c, ts, 128), lambda b, j: (b, 0, j, 0)),
                pl.BlockSpec((None, c, ts, 128), lambda b, j: (b, 0, j, 0)),
            ],
            out_specs=pl.BlockSpec((None, 3, c), lambda b, j: (b, 0, 0)),
            scratch_shapes=[pltpu.VMEM((3, c, acc_rows, 128), jnp.float32)],
        ),
        compiler_params=pltpu.CompilerParams(
            dimension_semantics=("parallel", "arbitrary"),
            vmem_limit_bytes=vmem_limit_bytes,
        ),
    )(x4, t4)


# ----------------------------------------------------------------------------
# Fallback path: hw not a multiple of 128.  Lane-tiled (c, tn) blocks (no
# padding copy); NaN-safe tail masking, out block resident across the j axis.
# ----------------------------------------------------------------------------
def _dice_sums_kernel_2d(x_ref, t_ref, out_ref, *, hw, tn, need_mask):
    """x_ref, t_ref: (c, tn); out_ref: (c, 3) accumulator resident across j."""
    j = pl.program_id(1)
    nj = pl.num_programs(1)

    @pl.when(j == 0)
    def _():
        out_ref[...] = jnp.zeros_like(out_ref)

    x = x_ref[...].astype(jnp.float32)
    t = t_ref[...].astype(jnp.float32)

    m = jnp.max(x, axis=0, keepdims=True)             # (1, tn)
    e = jnp.exp(x - m)
    denom = jnp.sum(e, axis=0, keepdims=True)
    sm = e * pl.reciprocal(denom, approx=False)

    def accumulate(sm_v, t_v):
        tp_c = jnp.sum(t_v * sm_v, axis=1, keepdims=True)   # (c, 1)
        ssm_c = jnp.sum(sm_v, axis=1, keepdims=True)         # (c, 1)
        st_c = jnp.sum(t_v, axis=1, keepdims=True)           # (c, 1)
        out_ref[...] += jnp.concatenate([tp_c, ssm_c, st_c], axis=1)

    if need_mask:
        @pl.when(j == nj - 1)
        def _():
            lane = lax.broadcasted_iota(jnp.int32, (1, tn), 1)
            valid = (j * tn + lane) < hw
            accumulate(jnp.where(valid, sm, 0.0), jnp.where(valid, t, 0.0))

        @pl.when(j != nj - 1)
        def _():
            accumulate(sm, t)
    else:
        accumulate(sm, t)


def _dice_sums_2d(x3, t3, *, hw, tn, vmem_limit_bytes):
    n, c = x3.shape[0], x3.shape[1]
    grid_j = pl.cdiv(hw, tn)
    need_mask = (hw % tn) != 0
    kernel = functools.partial(
        _dice_sums_kernel_2d, hw=hw, tn=tn, need_mask=need_mask)
    return pl.pallas_call(
        kernel,
        out_shape=jax.ShapeDtypeStruct((n, c, 3), jnp.float32),
        grid_spec=pltpu.PrefetchScalarGridSpec(
            num_scalar_prefetch=0,
            grid=(n, grid_j),
            in_specs=[
                pl.BlockSpec((None, c, tn), lambda b, j: (b, 0, j)),
                pl.BlockSpec((None, c, tn), lambda b, j: (b, 0, j)),
            ],
            out_specs=pl.BlockSpec((None, c, 3), lambda b, j: (b, 0, 0)),
        ),
        compiler_params=pltpu.CompilerParams(
            dimension_semantics=("parallel", "arbitrary"),
            vmem_limit_bytes=vmem_limit_bytes,
        ),
    )(x3, t3)


# ----------------------------------------------------------------------------
# Tile selection: largest legal tile under max_tile_bytes, preferring a
# divisor of the pixel extent so the masked tail disappears entirely.
# ----------------------------------------------------------------------------
def _pick_rows(np128, c, itemsize, max_tile_bytes):
    cap = max_tile_bytes // (c * 128 * itemsize)
    if np128 <= cap:
        return np128                       # full-extent block dim is always legal
    cap8 = max(8, (cap // 8) * 8)
    for ts in range(cap8, 0, -8):          # prefer a divisor -> no masked tail
        if np128 % ts == 0:
            return ts
    return cap8


def _pick_lanes(hw, c, itemsize, max_tile_bytes):
    cap = max_tile_bytes // (c * itemsize)
    if hw <= cap:
        return hw
    cap128 = max(128, (cap // 128) * 128)
    for tn in range(cap128, 0, -128):      # prefer a divisor -> no masked tail
        if hw % tn == 0:
            return tn
    return cap128


@functools.partial(
    jax.jit,
    static_argnames=("beta", "smooth", "max_tile_bytes", "vmem_limit_bytes"))
def dice_loss(inputs, target, beta=1.0, smooth=1e-15,
              max_tile_bytes=4 * 1024 * 1024,
              vmem_limit_bytes=40 * 1024 * 1024):
    """inputs, target: NCHW arrays of identical shape.

    `target` may be bf16 / int8 one-hot to cut HBM read traffic; the kernel
    casts to f32 in-register.  vmem_limit is kept <= 40 MiB (v7x has 64 MiB
    VMEM per core) and set explicitly (v5e's scoped default is only 16 MiB).
    """
    n, c, h, w = inputs.shape
    assert target.shape == (n, c, h, w)
    # TODO(synk): F.interpolate(bilinear, align_corners=True) branch for
    # mismatched spatial sizes is not implemented (shapes match here).
    hw = h * w

    if hw % 128 == 0:
        np128 = hw // 128
        ts = _pick_rows(np128, c, 4, max_tile_bytes)
        # Free views of the contiguous NCHW layout -- no transpose, no copy.
        x = inputs.reshape(n, c, np128, 128)
        t = target.reshape(n, c, np128, 128)
        sums = _dice_sums_3d(x, t, np128=np128, ts=ts,
                             vmem_limit_bytes=vmem_limit_bytes)   # (n, 3, c)
        tp = jnp.sum(sums[:, 0, :], axis=0)
        sum_sm = jnp.sum(sums[:, 1, :], axis=0)
        sum_t = jnp.sum(sums[:, 2, :], axis=0)
    else:
        tn = _pick_lanes(hw, c, 4, max_tile_bytes)
        x = inputs.reshape(n, c, hw)
        t = target.reshape(n, c, hw)
        sums = _dice_sums_2d(x, t, hw=hw, tn=tn,
                             vmem_limit_bytes=vmem_limit_bytes)   # (n, c, 3)
        tp = jnp.sum(sums[:, :, 0], axis=0)
        sum_sm = jnp.sum(sums[:, :, 1], axis=0)
        sum_t = jnp.sum(sums[:, :, 2], axis=0)

    fp = sum_sm - tp
    fn = sum_t - tp
    b2 = beta * beta
    score = ((1.0 + b2) * tp + smooth) / ((1.0 + b2) * tp + b2 * fn + fp + smooth)
    return 1.0 - jnp.mean(score)


def _reference_dice_loss(inputs, target, beta=1.0, smooth=1e-15):
    n, c, h, w = inputs.shape
    x = jnp.transpose(inputs, (0, 2, 3, 1)).reshape(n, -1, c)
    t = jnp.transpose(target, (0, 2, 3, 1)).reshape(n, -1, c).astype(jnp.float32)
    sm = jax.nn.softmax(x.astype(jnp.float32), axis=-1)
    tp = jnp.sum(t * sm, axis=(0, 1))
    fp = jnp.sum(sm, axis=(0, 1)) - tp
    fn = jnp.sum(t, axis=(0, 1)) - tp
    b2 = beta * beta
    score = ((1 + b2) * tp + smooth) / ((1 + b2) * tp + b2 * fn + fp + smooth)
    return 1.0 - jnp.mean(score)


if __name__ == "__main__":
    key = jax.random.PRNGKey(0)
    k1, k2 = jax.random.split(key)

    # Case 1: N=2, C=4, H=W=16 (hw=256, 3D fast path, single full-extent tile).
    # Target passed as bf16 one-hot (exact) to demo the reduced-HBM-traffic path.
    n, c, h, w = 2, 4, 16, 16
    inputs = jax.random.normal(k1, (n, c, h, w), dtype=jnp.float32)
    labels = jax.random.randint(k2, (n, h, w), 0, c)
    target = jnp.transpose(
        jax.nn.one_hot(labels, c, dtype=jnp.bfloat16), (0, 3, 1, 2))
    loss = dice_loss(inputs, target)
    jax.block_until_ready(loss)
    ref = _reference_dice_loss(inputs, target)
    assert jnp.isfinite(loss), loss
    assert jnp.allclose(loss, ref, atol=1e-3, rtol=1e-3), (loss, ref)

    # Case 2: hw=2304 (3D path), tiny tile cap forces ts=8 -> 3 tiles with a
    # masked 2-row tail (exercises the NaN-safe masked multi-tile 3D path).
    n2, c2, h2, w2 = 2, 4, 48, 48
    i2 = jax.random.normal(k1, (n2, c2, h2, w2), dtype=jnp.float32)
    l2 = jax.random.randint(k2, (n2, h2, w2), 0, c2)
    t2 = jnp.transpose(jax.nn.one_hot(l2, c2, dtype=jnp.float32), (0, 3, 1, 2))
    loss2 = dice_loss(i2, t2, max_tile_bytes=c2 * 128 * 4 * 8)
    jax.block_until_ready(loss2)
    ref2 = _reference_dice_loss(i2, t2)
    assert jnp.isfinite(loss2), loss2
    assert jnp.allclose(loss2, ref2, atol=1e-3, rtol=1e-3), (loss2, ref2)

    # Case 3: hw=576 (not a multiple of 128 -> 2D fallback), tiny tile cap
    # forces tn=128 -> 5 tiles with a masked 64-lane tail (previously NaN).
    n3, c3, h3, w3 = 2, 4, 24, 24
    i3 = jax.random.normal(k1, (n3, c3, h3, w3), dtype=jnp.float32)
    l3 = jax.random.randint(k2, (n3, h3, w3), 0, c3)
    t3 = jnp.transpose(jax.nn.one_hot(l3, c3, dtype=jnp.float32), (0, 3, 1, 2))
    loss3 = dice_loss(i3, t3, max_tile_bytes=128 * c3 * 4)
    jax.block_until_ready(loss3)
    ref3 = _reference_dice_loss(i3, t3)
    assert jnp.isfinite(loss3), loss3
    assert jnp.allclose(loss3, ref3, atol=1e-3, rtol=1e-3), (loss3, ref3)

    print("KERNEL_OK")
</pallas_src>

<mosaic_0001>
module attributes {stable_mosaic.version = 11 : i64} {
  func.func @_dice_sums_kernel_3d(%arg0: i32, %arg1: i32, %arg2: memref<1x4x2x128xf32, #tpu.memory_space<vmem>>, %arg3: memref<1x4x2x128xbf16, #tpu.memory_space<vmem>>, %arg4: memref<1x3x4xf32, #tpu.memory_space<vmem>>, %arg5: memref<3x4x2x128xf32, #tpu.memory_space<vmem>>) attributes {dimension_semantics = [#tpu.dimension_semantics<parallel>, #tpu.dimension_semantics<arbitrary>], iteration_bounds = array<i64: 2, 1>, scalar_prefetch = 0 : i64, scratch_operands = 1 : i64, tpu.core_type = #tpu.core_type<tc>, window_params = [{transform_indices = @transform_0, window_bounds = array<i64: 1, 4, 2, 128>}, {transform_indices = @transform_1, window_bounds = array<i64: 1, 4, 2, 128>}, {transform_indices = @transform_2, window_bounds = array<i64: 1, 3, 4>}]} {
    %c0_i32 = arith.constant 0 : i32
    %0 = arith.cmpi eq, %arg1, %c0_i32 : i32
    %1 = arith.extui %0 : i1 to i32
    %c0_i32_0 = arith.constant 0 : i32
    %2 = arith.cmpi ne, %1, %c0_i32_0 : i32
    scf.if %2 {
      %cst_33 = arith.constant 0.000000e+00 : f32
      %40 = vector.broadcast %cst_33 : f32 to vector<3x4x2x128xf32>
      %c0_34 = arith.constant 0 : index
      %c0_35 = arith.constant 0 : index
      %c0_36 = arith.constant 0 : index
      %c0_37 = arith.constant 0 : index
      %41 = vector.load %arg5[%c0_34, %c0_35, %c0_36, %c0_37] : memref<3x4x2x128xf32, #tpu.memory_space<vmem>>, vector<3x4x2x128xf32>
      tpu.vector_store %arg5[%c0_34, %c0_35, %c0_36, %c0_37], %40 {strides = array<i32>} : memref<3x4x2x128xf32, #tpu.memory_space<vmem>>, vector<3x4x2x128xf32>,
    } else {
    }
    %c0 = arith.constant 0 : index
    %c0_1 = arith.constant 0 : index
    %c0_2 = arith.constant 0 : index
    %c0_3 = arith.constant 0 : index
    %3 = vector.load %arg2[%c0, %c0_1, %c0_2, %c0_3] : memref<1x4x2x128xf32, #tpu.memory_space<vmem>>, vector<1x4x2x128xf32>
    %4 = vector.shape_cast %3 : vector<1x4x2x128xf32> to vector<4x2x128xf32>
    %c0_4 = arith.constant 0 : index
    %c0_5 = arith.constant 0 : index
    %c0_6 = arith.constant 0 : index
    %c0_7 = arith.constant 0 : index
    %5 = vector.load %arg3[%c0_4, %c0_5, %c0_6, %c0_7] : memref<1x4x2x128xbf16, #tpu.memory_space<vmem>>, vector<1x4x2x128xbf16>
    %6 = vector.shape_cast %5 : vector<1x4x2x128xbf16> to vector<4x2x128xbf16>
    %7 = arith.extf %6 : vector<4x2x128xbf16> to vector<4x2x128xf32>
    %cst = arith.constant dense<0xFF800000> : vector<2x128xf32>
    %8 = vector.multi_reduction <maximumf>, %4, %cst [0] : vector<4x2x128xf32> to vector<2x128xf32>
    %9 = vector.shape_cast %8 : vector<2x128xf32> to vector<1x2x128xf32>
    %10 = vector.broadcast %9 : vector<1x2x128xf32> to vector<4x2x128xf32>
    %11 = arith.subf %4, %10 : vector<4x2x128xf32>
    %12 = math.exp %11 : vector<4x2x128xf32>
    %cst_8 = arith.constant dense<0.000000e+00> : vector<2x128xf32>
    %13 = vector.multi_reduction <add>, %12, %cst_8 [0] : vector<4x2x128xf32> to vector<2x128xf32>
    %14 = vector.shape_cast %13 : vector<2x128xf32> to vector<1x2x128xf32>
    %15 = tpu.reciprocal %14 : vector<1x2x128xf32> -> vector<1x2x128xf32>
    %16 = vector.broadcast %15 : vector<1x2x128xf32> to vector<4x2x128xf32>
    %17 = arith.mulf %12, %16 : vector<4x2x128xf32>
    %18 = arith.mulf %7, %17 : vector<4x2x128xf32>
    %c0_9 = arith.constant 0 : index
    %c0_10 = arith.constant 0 : index
    %c0_11 = arith.constant 0 : index
    %c0_12 = arith.constant 0 : index
    %19 = vector.load %arg5[%c0_9, %c0_10, %c0_11, %c0_12] : memref<3x4x2x128xf32, #tpu.memory_space<vmem>>, vector<1x4x2x128xf32>
    %20 = vector.shape_cast %19 : vector<1x4x2x128xf32> to vector<4x2x128xf32>
    %21 = arith.addf %20, %18 : vector<4x2x128xf32>
    %c0_13 = arith.constant 0 : index
    %c0_14 = arith.constant 0 : index
    %c0_15 = arith.constant 0 : index
    %c0_16 = arith.constant 0 : index
    %22 = vector.load %arg5[%c0_13, %c0_14, %c0_15, %c0_16] : memref<3x4x2x128xf32, #tpu.memory_space<vmem>>, vector<1x4x2x128xf32>
    %23 = vector.shape_cast %22 : vector<1x4x2x128xf32> to vector<4x2x128xf32>
    %24 = vector.shape_cast %21 : vector<4x2x128xf32> to vector<1x4x2x128xf32>
    tpu.vector_store %arg5[%c0_13, %c0_14, %c0_15, %c0_16], %24 {strides = array<i32>} : memref<3x4x2x128xf32, #tpu.memory_space<vmem>>, vector<1x4x2x128xf32>,
    %c1 = arith.constant 1 : index
    %c0_17 = arith.constant 0 : index
    %c0_18 = arith.constant 0 : index
    %c0_19 = arith.constant 0 : index
    %25 = vector.load %arg5[%c1, %c0_17, %c0_18, %c0_19] : memref<3x4x2x128xf32, #tpu.memory_space<vmem>>, vector<1x4x2x128xf32>
    %26 = vector.shape_cast %25 : vector<1x4x2x128xf32> to vector<4x2x128xf32>
    %27 = arith.addf %26, %17 : vector<4x2x128xf32>
    %c1_20 = arith.constant 1 : index
    %c0_21 = arith.constant 0 : index
    %c0_22 = arith.constant 0 : index
    %c0_23 = arith.constant 0 : index
    %28 = vector.load %arg5[%c1_20, %c0_21, %c0_22, %c0_23] : memref<3x4x2x128xf32, #tpu.memory_space<vmem>>, vector<1x4x2x128xf32>
    %29 = vector.shape_cast %28 : vector<1x4x2x128xf32> to vector<4x2x128xf32>
    %30 = vector.shape_cast %27 : vector<4x2x128xf32> to vector<1x4x2x128xf32>
    tpu.vector_store %arg5[%c1_20, %c0_21, %c0_22, %c0_23], %30 {strides = array<i32>} : memref<3x4x2x128xf32, #tpu.memory_space<vmem>>, vector<1x4x2x128xf32>,
    %c2 = arith.constant 2 : index
    %c0_24 = arith.constant 0 : index
    %c0_25 = arith.constant 0 : index
    %c0_26 = arith.constant 0 : index
    %31 = vector.load %arg5[%c2, %c0_24, %c0_25, %c0_26] : memref<3x4x2x128xf32, #tpu.memory_space<vmem>>, vector<1x4x2x128xf32>
    %32 = vector.shape_cast %31 : vector<1x4x2x128xf32> to vector<4x2x128xf32>
    %33 = arith.addf %32, %7 : vector<4x2x128xf32>
    %c2_27 = arith.constant 2 : index
    %c0_28 = arith.constant 0 : index
    %c0_29 = arith.constant 0 : index
    %c0_30 = arith.constant 0 : index
    %34 = vector.load %arg5[%c2_27, %c0_28, %c0_29, %c0_30] : memref<3x4x2x128xf32, #tpu.memory_space<vmem>>, vector<1x4x2x128xf32>
    %35 = vector.shape_cast %34 : vector<1x4x2x128xf32> to vector<4x2x128xf32>
    %36 = vector.shape_cast %33 : vector<4x2x128xf32> to vector<1x4x2x128xf32>
    tpu.vector_store %arg5[%c2_27, %c0_28, %c0_29, %c0_30], %36 {strides = array<i32>} : memref<3x4x2x128xf32, #tpu.memory_space<vmem>>, vector<1x4x2x128xf32>,
    %c0_i32_31 = arith.constant 0 : i32
    %37 = arith.cmpi eq, %arg1, %c0_i32_31 : i32
    %38 = arith.extui %37 : i1 to i32
    %c0_i32_32 = arith.constant 0 : i32
    %39 = arith.cmpi ne, %38, %c0_i32_32 : i32
    scf.if %39 {
      %c0_33 = arith.constant 0 : index
      %c0_34 = arith.constant 0 : index
      %c0_35 = arith.constant 0 : index
      %c0_36 = arith.constant 0 : index
      %40 = vector.load %arg5[%c0_33, %c0_34, %c0_35, %c0_36] : memref<3x4x2x128xf32, #tpu.memory_space<vmem>>, vector<3x4x2x128xf32>
      %cst_37 = arith.constant dense<0.000000e+00> : vector<3x4x128xf32>
      %41 = vector.multi_reduction <add>, %40, %cst_37 [2] : vector<3x4x2x128xf32> to vector<3x4x128xf32>
      %cst_38 = arith.constant dense<0.000000e+00> : vector<3x4xf32>
      %42 = vector.multi_reduction <add>, %41, %cst_38 [2] : vector<3x4x128xf32> to vector<3x4xf32>
      %c0_39 = arith.constant 0 : index
      %c0_40 = arith.constant 0 : index
      %c0_41 = arith.constant 0 : index
      %43 = vector.load %arg4[%c0_39, %c0_40, %c0_41] : memref<1x3x4xf32, #tpu.memory_space<vmem>>, vector<1x3x4xf32>
      %44 = vector.shape_cast %43 : vector<1x3x4xf32> to vector<3x4xf32>
      %45 = vector.shape_cast %42 : vector<3x4xf32> to vector<1x3x4xf32>
      tpu.vector_store %arg4[%c0_39, %c0_40, %c0_41], %45 {strides = array<i32>} : memref<1x3x4xf32, #tpu.memory_space<vmem>>, vector<1x3x4xf32>,
    } else {
    }
    return
  }
  func.func @transform_0(%arg0: i32, %arg1: i32) -> (i32, i32, i32, i32) {
    %c0_i32 = arith.constant 0 : i32
    %c0_i32_0 = arith.constant 0 : i32
    %c0_i32_1 = arith.constant 0 : i32
    return %arg0, %c0_i32, %arg1, %c0_i32_0 : i32, i32, i32, i32
  }
  func.func @transform_1(%arg0: i32, %arg1: i32) -> (i32, i32, i32, i32) {
    %c0_i32 = arith.constant 0 : i32
    %c0_i32_0 = arith.constant 0 : i32
    %c0_i32_1 = arith.constant 0 : i32
    return %arg0, %c0_i32, %arg1, %c0_i32_0 : i32, i32, i32, i32
  }
  func.func @transform_2(%arg0: i32, %arg1: i32) -> (i32, i32, i32) {
    %c0_i32 = arith.constant 0 : i32
    %c0_i32_0 = arith.constant 0 : i32
    %c0_i32_1 = arith.constant 0 : i32
    return %arg0, %c0_i32, %c0_i32_0 : i32, i32, i32
  }
}

</mosaic_0001>

<llo_original>
// kernel: dice_loss.1
$region0: #{dice_loss.1}
  #allocation0 [shape = 'u32[]', space=smem, size = 0x4, offset = 0x4, fixed_abs, tag = 'smem constant byte address 0x4 - core index']
  #allocation1 [shape = 'u32[144,128]{1,0:T(1,128)}', space=vmem, size = 0x12000, scoped, tag = 'internal scratch']
  #allocation2 [shape = 'f32[3,4,2,128]{3,2,1,0:T(2,128)}', space=vmem, size = 0x3000, scoped, tag = 'scratch operand']
  %s0 = inlined_call_operand.vmem [shape: f32[2,4,2,128], index: 0, kind: input, shape index: {}]
  %s1 = inlined_call_operand.vmem [shape: bf16[2,4,2,128], index: 1, kind: input, shape index: {}]
  %s2 = inlined_call_operand.vmem [shape: f32[2,3,4], index: 2, kind: output, shape index: {}]
  %s3 = sld [smem:[#allocation0]]
  $region49: #{dice_loss.1} parent=0
    _
  %s5 = ssub.s32 1, %s3
  %s6 = scalar_select 0, %s5, %s3
  loop: start=0, step=1, limit=4
  $region2: #{dice_loss.1} parent=0 // loop_pre_header
    _
  $region3: #{dice_loss.1} parent=0 // loop_header
    %s8 = sphi 0, %s12
    %p9 = scmp.ge.s32.totalorder %s8, 4
    %s15 = sphi 0, %s27
    %s16 = sphi 0, %s23
    %s17 = sphi 0, %s15
    %s18 = sphi 0, %s16
    %s19 = sphi 0, %s17
    %s20 = sphi 0, %s18
    %s32 = sphi 0, %s34
    %s35 = sphi 0, %s32
    %s36 = sphi 0, %s35
    %s52 = sphi 0, %s36
    %s60 = sphi 0, %s62
    %s63 = sphi 0, %s60
    %s64 = sphi 0, %s63
    %s80 = sphi 0, %s64
    %s86 = sphi 0, %s88
    %s89 = sphi 0, %s86
    %s90 = sphi 0, %s89
    %s106 = sphi 0, %s90
  $region4: #{dice_loss.1} parent=0 // loop_header_branch
    %11 = sbr.rel (%p9) target = $region8
  $region5: #{dice_loss.1} parent=0 // loop_body
    %s13 = ssub.s32 %s8, 1
    %s14 = ssub.s32 %s8, 2
    %s21 = sadd.s32 1, %s16
    %p22 = scmp.ge.s32.totalorder %s21, 1
    %s23 = scalar_select %p22, 0, %s21
    %s24 = sadd.s32 1, %s15
    %s25 = scalar_select %p22, %s24, %s15
    %p26 = scmp.ge.s32.totalorder %s25, 2
    %s27 = scalar_select %p26, 0, %s25
    %s28 = ssub.s32 %s15, %s27
    %s29 = ssub.s32 %s16, %s23
    %s30 = sor.u32 %s28, %s29
    %p31 = scmp.eq.s32.totalorder %s30, 0
    %s33 = sadd.s32 %s32, 1
    %s34 = scalar_select %p31, %s32, %s33
    %p37 = pneg %p31
    %p38 = scmp.eq.s32.totalorder %s8, 1
    %p39 = por %p37, %p38
    %p40 = scmp.ne.s32.totalorder %s32, %s35
    %p41 = scmp.eq.s32.totalorder %s8, 0
    %p42 = por %p40, %p41
    %p43 = scmp.ne.s32.totalorder %s32, %s35
    %p44 = scmp.eq.s32.totalorder %s13, 1
    %p45 = por %p43, %p44
    %p46 = scmp.ne.s32.totalorder %s35, %s36
    %p47 = scmp.eq.s32.totalorder %s13, 0
    %p48 = por %p46, %p47
    %p49 = scmp.ne.s32.totalorder %s35, %s36
    %p50 = scmp.eq.s32.totalorder %s14, 1
    %p51 = por %p49, %p50
    %p53 = scmp.ne.s32.totalorder %s36, %s52
    %p54 = scmp.eq.s32.totalorder %s14, 0
    %p55 = por %p53, %p54
    %s56 = ssub.s32 %s15, %s27
    %s57 = ssub.s32 %s16, %s23
    %s58 = sor.u32 %s56, %s57
    %p59 = scmp.eq.s32.totalorder %s58, 0
    %s61 = sadd.s32 %s60, 1
    %s62 = scalar_select %p59, %s60, %s61
    %p65 = pneg %p59
    %p66 = scmp.eq.s32.totalorder %s8, 1
    %p67 = por %p65, %p66
    %p68 = scmp.ne.s32.totalorder %s60, %s63
    %p69 = scmp.eq.s32.totalorder %s8, 0
    %p70 = por %p68, %p69
    %p71 = scmp.ne.s32.totalorder %s60, %s63
    %p72 = scmp.eq.s32.totalorder %s13, 1
    %p73 = por %p71, %p72
    %p74 = scmp.ne.s32.totalorder %s63, %s64
    %p75 = scmp.eq.s32.totalorder %s13, 0
    %p76 = por %p74, %p75
    %p77 = scmp.ne.s32.totalorder %s63, %s64
    %p78 = scmp.eq.s32.totalorder %s14, 1
    %p79 = por %p77, %p78
    %p81 = scmp.ne.s32.totalorder %s64, %s80
    %p82 = scmp.eq.s32.totalorder %s14, 0
    %p83 = por %p81, %p82
    %s84 = ssub.s32 %s15, %s27
    %p85 = scmp.eq.s32.totalorder %s84, 0
    %s87 = sadd.s32 %s86, 1
    %s88 = scalar_select %p85, %s86, %s87
    %p91 = pneg %p85
    %p92 = scmp.eq.s32.totalorder %s8, 1
    %p93 = por %p91, %p92
    %p94 = scmp.ne.s32.totalorder %s86, %s89
    %p95 = scmp.eq.s32.totalorder %s8, 0
    %p96 = por %p94, %p95
    %p97 = scmp.ne.s32.totalorder %s86, %s89
    %p98 = scmp.eq.s32.totalorder %s13, 1
    %p99 = por %p97, %p98
    %p100 = scmp.ne.s32.totalorder %s89, %s90
    %p101 = scmp.eq.s32.totalorder %s13, 0
    %p102 = por %p100, %p101
    %p103 = scmp.ne.s32.totalorder %s89, %s90
    %p104 = scmp.eq.s32.totalorder %s14, 1
    %p105 = por %p103, %p104
    %p107 = scmp.ne.s32.totalorder %s90, %s106
    %p108 = scmp.eq.s32.totalorder %s14, 0
    %p109 = por %p107, %p108
    %p110 = scmp.le.s32.totalorder 1, %s8
    %p111 = scmp.lt.s32.totalorder %s8, 3
    %p112 = pnand %p110, %p111
    %p113 = pneg %p112
    // Predicated region
    $region9: #{dice_loss.1} parent=5 // pred_check
      _
    $region10: #{dice_loss.1} parent=5 // pred_check_branch
      %115 = sbr.rel (%p112) target = $region12
    $region11: #{dice_loss.1} parent=5 // pred_region
      %s116 = ssub.s32 %s8, 1
    $region12: #{dice_loss.1} parent=5 // pred_fallthru
      _
    %p117 = scmp.lt.s32.totalorder %s8, 2
    // Predicated region
    $region13: #{dice_loss.1} parent=5 // pred_check
      %p118 = pneg %p117
    $region14: #{dice_loss.1} parent=5 // pred_check_branch
      %120 = sbr.rel (%p118) target = $region16
    $region15: #{dice_loss.1} parent=5 // pred_region
      // Predicated region
      $region17: #{dice_loss.1} parent=15 // pred_check
        %p121 = pneg %p42
      $region18: #{dice_loss.1} parent=15 // pred_check_branch
        %123 = sbr.rel (%p121) target = $region20
      $region19: #{dice_loss.1} parent=15 // pred_region
        %p124 = scmp.lt.s32.totalorder %s15, 1
        %s125 = scalar_select %p124, %s15, 1
        %p126 = scmp.lt.s32.totalorder %s16, 0
        %s127 = scalar_select %p126, %s16, 0
        %s128 = smul.addr %s125, 4
        %s129 = sadd.s32 %s127, %s128
        %s130 = smul.addr %s129, 2
        %s131 = scalar_lea.vmem %s0, %s130
      $region20: #{dice_loss.1} parent=15 // pred_fallthru
        _
      // Predicated region
      $region21: #{dice_loss.1} parent=15 // pred_check
        %p132 = pneg %p70
      $region22: #{dice_loss.1} parent=15 // pred_check_branch
        %134 = sbr.rel (%p132) target = $region24
      $region23: #{dice_loss.1} parent=15 // pred_region
        %p135 = scmp.lt.s32.totalorder %s15, 1
        %s136 = scalar_select %p135, %s15, 1
        %p137 = scmp.lt.s32.totalorder %s16, 0
        %s138 = scalar_select %p137, %s16, 0
        %s139 = smul.addr %s136, 4
        %s140 = sadd.s32 %s138, %s139
        %s141 = scalar_lea.vmem %s1, %s140
      $region24: #{dice_loss.1} parent=15 // pred_fallthru
        _
    $region16: #{dice_loss.1} parent=5 // pred_fallthru
      _
    %p142 = scmp.le.s32.totalorder 1, %s8
    %p143 = scmp.lt.s32.totalorder %s8, 3
    %p144 = pnand %p142, %p143
    %p145 = pneg %p144
    // Predicated region
    $region25: #{dice_loss.1} parent=5 // pred_check
      _
    $region26: #{dice_loss.1} parent=5 // pred_check_branch
      %147 = sbr.rel (%p144) target = $region28
    $region27: #{dice_loss.1} parent=5 // pred_region
      %s148 = ssub.s32 %s8, 1
      %p149 = scmp.lt.s32.totalorder %s17, 1
      %s150 = scalar_select %p149, %s17, 1
      %p151 = scmp.lt.s32.totalorder %s18, 0
      %s152 = scalar_select %p151, %s18, 0
      %s153 = smul.addr %s150, 4
      %s154 = sadd.s32 %s152, %s153
      %s155 = smul.addr %s154, 2
      %s156 = scalar_lea.vmem %s0, %s155
      %p157 = pneg %p48
      %p158 = pneg %p45
      %p159 = scmp.lt.s32.totalorder %s17, 1
      %s160 = scalar_select %p159, %s17, 1
      %p161 = scmp.lt.s32.totalorder %s18, 0
      %s162 = scalar_select %p161, %s18, 0
      %s163 = smul.addr %s160, 4
      %s164 = sadd.s32 %s162, %s163
      %s165 = scalar_lea.vmem %s1, %s164
      %p166 = pneg %p76
      %p167 = pneg %p73
      %p168 = pneg %p102
      %p169 = pneg %p99
      %p170 = scmp.lt.s32.totalorder %s17, 1
      %s171 = scalar_select %p170, %s17, 1
      %s172 = smul.addr %s171, 4
      %s173 = scalar_lea.vmem %s2, %s172
      %p174 = scmp.lt.s32.totalorder %s17, 1
      %s175 = scalar_select %p174, %s17, 1
      %p176 = scmp.lt.s32.totalorder %s18, 0
      %s177 = scalar_select %p176, %s18, 0
      %s178 = smul.addr %s175, 4
      %s179 = sadd.s32 %s177, %s178
      %s180 = smul.addr %s179, 2
      %s181 = scalar_lea.vmem %s0, %s180
      %p182 = scmp.lt.s32.totalorder %s17, 1
      %s183 = scalar_select %p182, %s17, 1
      %p184 = scmp.lt.s32.totalorder %s18, 0
      %s185 = scalar_select %p184, %s18, 0
      %s186 = smul.addr %s183, 4
      %s187 = sadd.s32 %s185, %s186
      %s188 = scalar_lea.vmem %s1, %s187
      %p189 = scmp.lt.s32.totalorder %s17, 1
      %s190 = scalar_select %p189, %s17, 1
      %s191 = smul.addr %s190, 4
      %s192 = scalar_lea.vmem %s2, %s191
      %p193 = scmp.eq.s32.totalorder %s18, 0
      // Predicated region
      $region29: #{dice_loss.1} parent=27 // pred_check
        %p194 = pneg %p193
      $region30: #{dice_loss.1} parent=27 // pred_check_branch
        %196 = sbr.rel (%p194) target = $region32
      $region31: #{dice_loss.1} parent=27 // pred_region
        %197 = vst [vmem:[#allocation2] sm:$0x3] 0.0
        %198 = vst [vmem:[#allocation2 + $0x2] sm:$0x3] 0.0
        %199 = vst [vmem:[#allocation2 + $0x4] sm:$0x3] 0.0
        %200 = vst [vmem:[#allocation2 + $0x6] sm:$0x3] 0.0
        %201 = vst [vmem:[#allocation2 + $0x8] sm:$0x3] 0.0
        %202 = vst [vmem:[#allocation2 + $0xa] sm:$0x3] 0.0
        %203 = vst [vmem:[#allocation2 + $0xc] sm:$0x3] 0.0
        %204 = vst [vmem:[#allocation2 + $0xe] sm:$0x3] 0.0
        %205 = vst [vmem:[#allocation2 + $0x10] sm:$0x3] 0.0
        %206 = vst [vmem:[#allocation2 + $0x12] sm:$0x3] 0.0
        %207 = vst [vmem:[#allocation2 + $0x14] sm:$0x3] 0.0
        %208 = vst [vmem:[#allocation2 + $0x16] sm:$0x3] 0.0
      $region32: #{dice_loss.1} parent=27 // pred_fallthru
        _
      %v209 = vld [vmem:[%s181] sm:$0x3]
      %v210 = vld [vmem:[%s181 + $0x2] sm:$0x3]
      %v211 = vld [vmem:[%s181 + $0x4] sm:$0x3]
      %v212 = vld [vmem:[%s181 + $0x6] sm:$0x3]
      %v213 = vld [vmem:[%s188] sm:$0x1]
      %v214 = vld [vmem:[%s188 + $0x1] sm:$0x1]
      %v215 = vld [vmem:[%s188 + $0x2] sm:$0x1]
      %v216 = vld [vmem:[%s188 + $0x3] sm:$0x1]
      %v217 = vunpack.c.l.bf16 %v213
      %v218 = vunpack.c.l.bf16 %v214
      %v219 = vunpack.c.l.bf16 %v215
      %v220 = vunpack.c.l.bf16 %v216
      %vm221 = vcmask 1041408
      %v222 = vsel %vm221, %v209, -inf
      %v223 = vsel %vm221, %v210, -inf
      %v224 = vsel %vm221, %v211, -inf
      %v225 = vsel %vm221, %v212, -inf
      %v226 = vmax.f32 %v222, %v223
      %v227 = vmax.f32 %v224, %v225
      %v228 = vmax.f32 %v226, %v227
      %v229 = vsub.f32 %v209, %v228
      %v230 = vsub.f32 %v210, %v228
      %v231 = vsub.f32 %v211, %v228
      %v232 = vsub.f32 %v212, %v228
      %v233 = vmul.f32 %v229, 1.442695
      %v234 = vpow.pop %v233
      %v235 = vmul.f32 %v230, 1.442695
      %v236 = vpow.pop %v235
      %v237 = vmul.f32 %v231, 1.442695
      %v238 = vpow.pop %v237
      %v239 = vmul.f32 %v232, 1.442695
      %v240 = vpow.pop %v239
      %v241 = vsel %vm221, %v234, 0.0
      %v242 = vsel %vm221, %v236, 0.0
      %v243 = vadd.f32 %v241, %v242
      %v244 = vsel %vm221, %v238, 0.0
      %v245 = vadd.f32 %v243, %v244
      %v246 = vsel %vm221, %v240, 0.0
      %v247 = vadd.f32 %v245, %v246
      %v248 = vrcp.pop %v247
      %v249 = vmul.f32 %v234, %v248
      %v250 = vmul.f32 %v236, %v248
      %v251 = vmul.f32 %v238, %v248
      %v252 = vmul.f32 %v240, %v248
      %v253 = vmul.f32 %v217, %v249
      %v254 = vmul.f32 %v218, %v250
      %v255 = vmul.f32 %v219, %v251
      %v256 = vmul.f32 %v220, %v252
      %v257 = vld [vmem:[#allocation2] sm:$0x3]
      %v258 = vld [vmem:[#allocation2 + $0x2] sm:$0x3]
      %v259 = vld [vmem:[#allocation2 + $0x4] sm:$0x3]
      %v260 = vld [vmem:[#allocation2 + $0x6] sm:$0x3]
      %v261 = vadd.f32 %v257, %v253
      %v262 = vadd.f32 %v258, %v254
      %v263 = vadd.f32 %v259, %v255
      %v264 = vadd.f32 %v260, %v256
      %265 = vst [vmem:[#allocation2] sm:$0x3] %v261
      %266 = vst [vmem:[#allocation2 + $0x2] sm:$0x3] %v262
      %267 = vst [vmem:[#allocation2 + $0x4] sm:$0x3] %v263
      %268 = vst [vmem:[#allocation2 + $0x6] sm:$0x3] %v264
      %s269 = scalar_lea.vmem [#allocation2], 8
      %v270 = vld [vmem:[%s269] sm:$0x3]
      %v271 = vld [vmem:[%s269 + $0x2] sm:$0x3]
      %v272 = vld [vmem:[%s269 + $0x4] sm:$0x3]
      %v273 = vld [vmem:[%s269 + $0x6] sm:$0x3]
      %v274 = vadd.f32 %v270, %v249
      %v275 = vadd.f32 %v271, %v250
      %v276 = vadd.f32 %v272, %v251
      %v277 = vadd.f32 %v273, %v252
      %278 = vst [vmem:[%s269] sm:$0x3] %v274
      %279 = vst [vmem:[%s269 + $0x2] sm:$0x3] %v275
      %280 = vst [vmem:[%s269 + $0x4] sm:$0x3] %v276
      %281 = vst [vmem:[%s269 + $0x6] sm:$0x3] %v277
      %s282 = scalar_lea.vmem [#allocation2], 16
      %v283 = vld [vmem:[%s282] sm:$0x3]
      %v284 = vld [vmem:[%s282 + $0x2] sm:$0x3]
      %v285 = vld [vmem:[%s282 + $0x4] sm:$0x3]
      %v286 = vld [vmem:[%s282 + $0x6] sm:$0x3]
      %v287 = vadd.f32 %v283, %v217
      %v288 = vadd.f32 %v284, %v218
      %v289 = vadd.f32 %v285, %v219
      %v290 = vadd.f32 %v286, %v220
      %291 = vst [vmem:[%s282] sm:$0x3] %v287
      %292 = vst [vmem:[%s282 + $0x2] sm:$0x3] %v288
      %293 = vst [vmem:[%s282 + $0x4] sm:$0x3] %v289
      %294 = vst [vmem:[%s282 + $0x6] sm:$0x3] %v290
      // Predicated region
      $region33: #{dice_loss.1} parent=27 // pred_check
        %p295 = pneg %p193
      $region34: #{dice_loss.1} parent=27 // pred_check_branch
        %297 = sbr.rel (%p295) target = $region36
      $region35: #{dice_loss.1} parent=27 // pred_region
        %v298 = vld [vmem:[#allocation2] sm:$0x3]
        %v299 = vld [vmem:[#allocation2 + $0x2] sm:$0x3]
        %v300 = vld [vmem:[#allocation2 + $0x4] sm:$0x3]
        %v301 = vld [vmem:[#allocation2 + $0x6] sm:$0x3]
        %v302 = vld [vmem:[#allocation2 + $0x8] sm:$0x3]
        %v303 = vld [vmem:[#allocation2 + $0xa] sm:$0x3]
        %v304 = vld [vmem:[#allocation2 + $0xc] sm:$0x3]
        %v305 = vld [vmem:[#allocation2 + $0xe] sm:$0x3]
        %v306 = vld [vmem:[#allocation2 + $0x10] sm:$0x3]
        %v307 = vld [vmem:[#allocation2 + $0x12] sm:$0x3]
        %v308 = vld [vmem:[#allocation2 + $0x14] sm:$0x3]
        %v309 = vld [vmem:[#allocation2 + $0x16] sm:$0x3]
        %v310 = vsel %vm221, %v298, 0.0
        %v311 = vrot.slane %v310, 4
        %v312 = vadd.f32 %v310, %v311
        %v313 = vrot.slane %v312, 2
        %v314 = vadd.f32 %v312, %v313
        %v315 = vrot.slane %v314, 1
        %v316 = vadd.f32 %v314, %v315
        %v317 = vsel %vm221, %v299, 0.0
        %v318 = vrot.slane %v317, 4
        %v319 = vadd.f32 %v317, %v318
        %v320 = vrot.slane %v319, 2
        %v321 = vadd.f32 %v319, %v320
        %v322 = vrot.slane %v321, 1
        %v323 = vadd.f32 %v321, %v322
        %v324 = vsel %vm221, %v300, 0.0
        %v325 = vrot.slane %v324, 4
        %v326 = vadd.f32 %v324, %v325
        %v327 = vrot.slane %v326, 2
        %v328 = vadd.f32 %v326, %v327
        %v329 = vrot.slane %v328, 1
        %v330 = vadd.f32 %v328, %v329
        %v331 = vsel %vm221, %v301, 0.0
        %v332 = vrot.slane %v331, 4
        %v333 = vadd.f32 %v331, %v332
        %v334 = vrot.slane %v333, 2
        %v335 = vadd.f32 %v333, %v334
        %v336 = vrot.slane %v335, 1
        %v337 = vadd.f32 %v335, %v336
        %v338 = vsel %vm221, %v302, 0.0
        %v339 = vrot.slane %v338, 4
        %v340 = vadd.f32 %v338, %v339
        %v341 = vrot.slane %v340, 2
        %v342 = vadd.f32 %v340, %v341
        %v343 = vrot.slane %v342, 1
        %v344 = vadd.f32 %v342, %v343
        %v345 = vsel %vm221, %v303, 0.0
        %v346 = vrot.slane %v345, 4
        %v347 = vadd.f32 %v345, %v346
        %v348 = vrot.slane %v347, 2
        %v349 = vadd.f32 %v347, %v348
        %v350 = vrot.slane %v349, 1
        %v351 = vadd.f32 %v349, %v350
        %v352 = vsel %vm221, %v304, 0.0
        %v353 = vrot.slane %v352, 4
        %v354 = vadd.f32 %v352, %v353
        %v355 = vrot.slane %v354, 2
        %v356 = vadd.f32 %v354, %v355
        %v357 = vrot.slane %v356, 1
        %v358 = vadd.f32 %v356, %v357
        %v359 = vsel %vm221, %v305, 0.0
        %v360 = vrot.slane %v359, 4
        %v361 = vadd.f32 %v359, %v360
        %v362 = vrot.slane %v361, 2
        %v363 = vadd.f32 %v361, %v362
        %v364 = vrot.slane %v363, 1
        %v365 = vadd.f32 %v363, %v364
        %v366 = vsel %vm221, %v306, 0.0
        %v367 = vrot.slane %v366, 4
        %v368 = vadd.f32 %v366, %v367
        %v369 = vrot.slane %v368, 2
        %v370 = vadd.f32 %v368, %v369
        %v371 = vrot.slane %v370, 1
        %v372 = vadd.f32 %v370, %v371
        %v373 = vsel %vm221, %v307, 0.0
        %v374 = vrot.slane %v373, 4
        %v375 = vadd.f32 %v373, %v374
        %v376 = vrot.slane %v375, 2
        %v377 = vadd.f32 %v375, %v376
        %v378 = vrot.slane %v377, 1
        %v379 = vadd.f32 %v377, %v378
        %v380 = vsel %vm221, %v308, 0.0
        %v381 = vrot.slane %v380, 4
        %v382 = vadd.f32 %v380, %v381
        %v383 = vrot.slane %v382, 2
        %v384 = vadd.f32 %v382, %v383
        %v385 = vrot.slane %v384, 1
        %v386 = vadd.f32 %v384, %v385
        %v387 = vsel %vm221, %v309, 0.0
        %v388 = vrot.slane %v387, 4
        %v389 = vadd.f32 %v387, %v388
        %v390 = vrot.slane %v389, 2
        %v391 = vadd.f32 %v389, %v390
        %v392 = vrot.slane %v391, 1
        %v393 = vadd.f32 %v391, %v392
        %vm406 = vcmask 1041409
        %v407 = vsel %vm406, %v323, %v316
        %vm408 = vcmask 1042434
        %v409 = vsel %vm408, %v330, %v407
        %vm410 = vcmask 1043459
        %v411 = vsel %vm410, %v337, %v409
        %v412 = vsel %vm406, %v351, %v344
        %v413 = vsel %vm408, %v358, %v412
        %v414 = vsel %vm410, %v365, %v413
        %v415 = vsel %vm406, %v379, %v372
        %v416 = vsel %vm408, %v386, %v415
        %v417 = vsel %vm410, %v393, %v416
        %vm421 = vcmask 1043456
        %v422 = vsel %vm421, %v411, 0.0
        %423 = vadd.xlane.f32.xlu0 %v422
        %v424 = vpop.xlane.xlu0 %423
        %v425 = vsel %vm421, %v414, 0.0
        %426 = vadd.xlane.f32.xlu0 %v425
        %v427 = vpop.xlane.xlu0 %426
        %v428 = vsel %vm421, %v417, 0.0
        %429 = vadd.xlane.f32.xlu0 %v428
        %v430 = vpop.xlane.xlu0 %429
        %v434 = vlaneseq
        %v435 = vand.u32 %v434, 127
        %v436 = vlaneseq
        %v437 = vshrl.u32 %v436, 7
        %v438 = vsub.s32 %v435, %v437
        %v439 = vrot.slane %v424, %v438
        %v440 = vlaneseq
        %v441 = vshrl.u32 %v440, 7
        %v442 = vsub.s32 %v435, %v441
        %v443 = vrot.slane %v427, %v442
        %v444 = vlaneseq
        %v445 = vshrl.u32 %v444, 7
        %v446 = vsub.s32 %v435, %v445
        %v447 = vrot.slane %v430, %v446
        %v448 = vsel %vm406, %v443, %v439
        %v449 = vsel %vm408, %v447, %v448
        %vm451 = vcmask 26624
        %452 = vst.msk [vmem:[%s192] sm:$0x7] %vm451, %v449
      $region36: #{dice_loss.1} parent=27 // pred_fallthru
        _
      %p453 = scmp.lt.s32.totalorder %s17, 1
      %s454 = scalar_select %p453, %s17, 1
      %s455 = smul.addr %s454, 4
      %s456 = scalar_lea.vmem %s2, %s455
      // Predicated region
      $region37: #{dice_loss.1} parent=27 // pred_check
        %p457 = pneg %p99
      $region38: #{dice_loss.1} parent=27 // pred_check_branch
        %459 = sbr.rel (%p457) target = $region40
      $region39: #{dice_loss.1} parent=27 // pred_region
        _
      $region40: #{dice_loss.1} parent=27 // pred_fallthru
        _
    $region28: #{dice_loss.1} parent=5 // pred_fallthru
      _
    %p460 = scmp.le.s32.totalorder 2, %s8
    // Predicated region
    $region41: #{dice_loss.1} parent=5 // pred_check
      %p461 = pneg %p460
    $region42: #{dice_loss.1} parent=5 // pred_check_branch
      %463 = sbr.rel (%p461) target = $region44
    $region43: #{dice_loss.1} parent=5 // pred_region
      %s464 = ssub.s32 %s8, 2
      // Predicated region
      $region45: #{dice_loss.1} parent=43 // pred_check
        %p465 = pneg %p105
      $region46: #{dice_loss.1} parent=43 // pred_check_branch
        %467 = sbr.rel (%p465) target = $region48
      $region47: #{dice_loss.1} parent=43 // pred_region
        %p468 = scmp.lt.s32.totalorder %s19, 1
        %s469 = scalar_select %p468, %s19, 1
        %s470 = smul.addr %s469, 4
        %s471 = scalar_lea.vmem %s2, %s470
      $region48: #{dice_loss.1} parent=43 // pred_fallthru
        _
    $region44: #{dice_loss.1} parent=5 // pred_fallthru
      _
  $region6: #{dice_loss.1} parent=0 // loop_footer
    %s12 = sadd.s32 1, %s8
  $region7: #{dice_loss.1} parent=0 // loop_footer_branch
    %7 = sbr.rel target = $region3
  $region8: #{dice_loss.1} parent=0 // loop_exit
    _

</llo_original>
